<compile_context>
chip_gen: v7x
topology: tpu7x:2x2x1
jax: 0.10.0
libtpu: 0.0.40
codegen_flags: <defaults>
</compile_context>

<pallas_src>
import functools

import jax
import jax.numpy as jnp
from jax.experimental import pallas as pl
from jax.experimental.pallas import tpu as pltpu

_LANE = 128
_SUBLANE = 8


def _round_up(x, m):
    return (x + m - 1) // m * m


def _activation_dtype():
    """bf16 bias/tanh/sigmoid on v6e/v7x (bf16 VPU+EUP); fp32 on v5e and older."""
    try:
        kind = jax.devices()[0].device_kind.lower()
    except Exception:
        return jnp.float32
    for old in ("v2", "v3", "v4", "v5"):
        if old in kind:
            return jnp.float32
    return jnp.bfloat16


def _pick_batch_tile(B):
    """Largest tile that still leaves >=2 grid steps (amortizes ~0.35us/step
    overhead and lets dimension_semantics=('parallel',) shard across v7x's 2 TCs)."""
    for cand in (4096, 2048, 1024, 512, 256, 128):
        if B >= 2 * cand:
            return cand
    if B > _SUBLANE:
        # Small batch: two sublane-aligned tiles so there are still 2 grid steps.
        return _round_up(-(-B // 2), _SUBLANE)
    return _SUBLANE


def _decoder_kernel(h_ref, w1_ref, b1_ref, w2_ref, b2_ref, w3_ref, b3_ref,
                    p_ref, *, act_dtype):
    """Fused 3-layer MLP: tanh(L1) -> tanh(L2) -> sigmoid(L3).

    Matmuls run with bf16 operands + fp32 accumulation on the MXU.  Bias adds
    and activations run in `act_dtype` (bf16 on v6e/v7x, fp32 on v5e).
    """
    h = h_ref[...].astype(jnp.bfloat16)          # no-op if producer already bf16

    # Layer 1: hidden -> 200
    z1 = jnp.dot(h, w1_ref[...], preferred_element_type=jnp.float32)
    a1 = jnp.tanh(z1.astype(act_dtype) + b1_ref[...])

    # Layer 2: 200 -> 200
    z2 = jnp.dot(a1.astype(jnp.bfloat16), w2_ref[...],
                 preferred_element_type=jnp.float32)
    a2 = jnp.tanh(z2.astype(act_dtype) + b2_ref[...])

    # Layer 3: 200 -> out (lane-padded)
    z3 = jnp.dot(a2.astype(jnp.bfloat16), w3_ref[...],
                 preferred_element_type=jnp.float32)
    p_ref[...] = jax.nn.sigmoid(z3.astype(act_dtype) + b3_ref[...]).astype(p_ref.dtype)


def aiwae_decoder_forward(h, params, *, batch_tile=None, out_dtype=jnp.bfloat16,
                          return_padded=False):
    """AIWAE decoder forward pass via a fused Pallas kernel.

    h:      (B, hidden_size), fp32 or bf16 (bf16 is cheaper — no wrapper cast is added).
    params: dict with w1 (hidden,200), b1 (1,200), w2 (200,200), b2 (1,200),
            w3 (200,out), b3 (1,out) stored as (in_features, out_features),
            i.e. equivalent to PyTorch's x @ W.T + b.
    Returns (B, out) probabilities in `out_dtype` (bf16 by default to halve the
    dominant HBM write).  With return_padded=True the raw (B_pad, out_pad) block
    is returned: rows >= B are from zero-padded inputs and cols >= out hold
    sigmoid(0)=0.5 — the consumer must ignore them.
    """
    B, hidden = h.shape
    mid = params["w1"].shape[1]
    out_size = params["w3"].shape[1]
    act_dtype = _activation_dtype()

    # Lane-dense output: zero-pad output columns up to a multiple of 128 so the
    # final stores are unmasked vst instead of masked partial stores.
    out_pad = _round_up(out_size, _LANE)
    w3 = params["w3"]
    b3 = params["b3"]
    if out_pad != out_size:
        w3 = jnp.pad(w3, ((0, 0), (0, out_pad - out_size)))
        b3 = jnp.pad(b3, ((0, 0), (0, out_pad - out_size)))

    # bf16 weights: native MXU inputs + half the weight DMA bytes.
    w1 = params["w1"].astype(jnp.bfloat16)
    w2 = params["w2"].astype(jnp.bfloat16)
    w3 = w3.astype(jnp.bfloat16)
    b1 = params["b1"].astype(act_dtype)
    b2 = params["b2"].astype(act_dtype)
    b3 = b3.astype(act_dtype)

    # Batch tiling: pad B up to a multiple of the tile instead of collapsing to
    # a single full-batch block (keeps pipelining + megacore for awkward B).
    tb = _pick_batch_tile(B) if batch_tile is None else _round_up(int(batch_tile), _SUBLANE)
    B_pad = _round_up(B, tb)
    h_in = jnp.pad(h, ((0, B_pad - B), (0, 0))) if B_pad != B else h
    grid = (B_pad // tb,)

    kernel = functools.partial(_decoder_kernel, act_dtype=act_dtype)

    flops = 2 * B_pad * (hidden * mid + mid * mid + mid * out_pad)
    transcendentals = B_pad * (2 * mid + out_pad)
    bytes_accessed = (
        h_in.size * h_in.dtype.itemsize
        + (w1.size + w2.size + w3.size) * 2
        + (b1.size + b2.size + b3.size) * jnp.dtype(act_dtype).itemsize
        + B_pad * out_pad * jnp.dtype(out_dtype).itemsize
    )

    def build_and_call(weight_mode):
        def wspec(shape):
            # Grid-invariant weights/biases: index_map is constant, so a single
            # VMEM buffer suffices when single-buffering is supported.
            if weight_mode is None:
                return pl.BlockSpec(shape, lambda i: (0, 0))
            return pl.BlockSpec(shape, lambda i: (0, 0), pipeline_mode=weight_mode)

        in_specs = [
            pl.BlockSpec((tb, hidden), lambda i: (i, 0)),   # h: tiled over batch
            wspec((hidden, mid)),                           # w1
            wspec((1, mid)),                                # b1
            wspec((mid, mid)),                              # w2
            wspec((1, mid)),                                # b2
            wspec((mid, out_pad)),                          # w3 (padded cols)
            wspec((1, out_pad)),                            # b3 (padded cols)
        ]
        out_spec = pl.BlockSpec((tb, out_pad), lambda i: (i, 0))

        return pl.pallas_call(
            kernel,
            out_shape=jax.ShapeDtypeStruct((B_pad, out_pad), out_dtype),
            grid=grid,
            in_specs=in_specs,
            out_specs=out_spec,
            compiler_params=pltpu.CompilerParams(
                dimension_semantics=("parallel",),
                vmem_limit_bytes=48 * 1024 * 1024,   # room for tb=2048/4096 on v5e too
            ),
            cost_estimate=pl.CostEstimate(
                flops=flops,
                transcendentals=transcendentals,
                bytes_accessed=bytes_accessed,
            ),
        )(h_in, w1, b1, w2, b2, w3, b3)

    try:
        p_padded = build_and_call(pl.Buffered(1))
    except Exception:
        # Fall back to default double-buffering if single-buffering is rejected.
        p_padded = build_and_call(None)

    if return_padded:
        return p_padded
    if B_pad != B or out_pad != out_size:
        return p_padded[:B, :out_size]
    return p_padded


def init_decoder_params(key, hidden_size, output_size):
    """Deterministic init mimicking nn.Linear default (uniform +-1/sqrt(fan_in))."""
    def linear(k, fan_in, fan_out):
        kw, kb = jax.random.split(k)
        bound = 1.0 / jnp.sqrt(fan_in)
        w = jax.random.uniform(kw, (fan_in, fan_out), jnp.float32, -bound, bound)
        b = jax.random.uniform(kb, (1, fan_out), jnp.float32, -bound, bound)
        return w, b

    k1, k2, k3 = jax.random.split(key, 3)
    w1, b1 = linear(k1, hidden_size, 200)
    w2, b2 = linear(k2, 200, 200)
    w3, b3 = linear(k3, 200, output_size)
    return {"w1": w1, "b1": b1, "w2": w2, "b2": b2, "w3": w3, "b3": b3}


def decoder_forward_ref(h, params):
    """Pure-JAX fp32 reference matching the PyTorch module semantics."""
    a1 = jnp.tanh(h @ params["w1"] + params["b1"])
    a2 = jnp.tanh(a1 @ params["w2"] + params["b2"])
    return jax.nn.sigmoid(a2 @ params["w3"] + params["b3"])


if __name__ == "__main__":
    hidden_size = 32
    output_size = 64
    batch = 8

    key = jax.random.PRNGKey(0)
    k_param, k_h = jax.random.split(key)

    params = init_decoder_params(k_param, hidden_size, output_size)
    h = jax.random.normal(k_h, (batch, hidden_size), dtype=jnp.float32)

    p = aiwae_decoder_forward(h, params)
    p = jax.block_until_ready(p)

    p_ref = decoder_forward_ref(h, params)
    assert p.shape == (batch, output_size)
    # bf16 weights/output (and bf16 activations on v6e/v7x) -> loose tolerance
    # vs. the fp32 reference; values are bounded sigmoid probabilities.
    assert jnp.allclose(p.astype(jnp.float32), p_ref, atol=4e-2, rtol=4e-2), \
        "mismatch vs reference"

    # TODO(synk): calc_logPxh (Gaussian prior + Bernoulli log-likelihood reduction)
    # is not part of forward(); omitted.
    print("KERNEL_OK")
</pallas_src>

<mosaic_0001>
module attributes {stable_mosaic.version = 11 : i64} {
  func.func @_decoder_kernel(%arg0: i32, %arg1: memref<8x32xf32, #tpu.memory_space<vmem>>, %arg2: memref<32x200xbf16, #tpu.memory_space<vmem>>, %arg3: memref<1x200xbf16, #tpu.memory_space<vmem>>, %arg4: memref<200x200xbf16, #tpu.memory_space<vmem>>, %arg5: memref<1x200xbf16, #tpu.memory_space<vmem>>, %arg6: memref<200x128xbf16, #tpu.memory_space<vmem>>, %arg7: memref<1x128xbf16, #tpu.memory_space<vmem>>, %arg8: memref<8x128xbf16, #tpu.memory_space<vmem>>) attributes {dimension_semantics = [#tpu.dimension_semantics<parallel>], iteration_bounds = array<i64: 1>, scalar_prefetch = 0 : i64, scratch_operands = 0 : i64, tpu.core_type = #tpu.core_type<tc>, window_params = [{transform_indices = @transform_0, window_bounds = array<i64: 8, 32>}, {pipeline_mode = #tpu.pipeline_mode<synchronous>, transform_indices = @transform_1, window_bounds = array<i64: 32, 200>}, {pipeline_mode = #tpu.pipeline_mode<synchronous>, transform_indices = @transform_2, window_bounds = array<i64: 1, 200>}, {pipeline_mode = #tpu.pipeline_mode<synchronous>, transform_indices = @transform_3, window_bounds = array<i64: 200, 200>}, {pipeline_mode = #tpu.pipeline_mode<synchronous>, transform_indices = @transform_4, window_bounds = array<i64: 1, 200>}, {pipeline_mode = #tpu.pipeline_mode<synchronous>, transform_indices = @transform_5, window_bounds = array<i64: 200, 128>}, {pipeline_mode = #tpu.pipeline_mode<synchronous>, transform_indices = @transform_6, window_bounds = array<i64: 1, 128>}, {transform_indices = @transform_7, window_bounds = array<i64: 8, 128>}]} {
    %c0 = arith.constant 0 : index
    %c0_0 = arith.constant 0 : index
    %0 = vector.load %arg1[%c0, %c0_0] : memref<8x32xf32, #tpu.memory_space<vmem>>, vector<8x32xf32>
    %1 = arith.truncf %0 : vector<8x32xf32> to vector<8x32xbf16>
    %c0_1 = arith.constant 0 : index
    %c0_2 = arith.constant 0 : index
    %2 = vector.load %arg2[%c0_1, %c0_2] : memref<32x200xbf16, #tpu.memory_space<vmem>>, vector<32x200xbf16>
    %cst = arith.constant dense<0.000000e+00> : vector<8x200xf32>
    %3 = tpu.matmul %1, %2, %cst {dimension_numbers = #tpu.dot_dimension_numbers<[1], [0], [0], [1], [0, 0, 1, 1], [], []>} : vector<8x32xbf16>, vector<32x200xbf16>, vector<8x200xf32> -> vector<8x200xf32>
    %4 = arith.truncf %3 : vector<8x200xf32> to vector<8x200xbf16>
    %c0_3 = arith.constant 0 : index
    %c0_4 = arith.constant 0 : index
    %5 = vector.load %arg3[%c0_3, %c0_4] : memref<1x200xbf16, #tpu.memory_space<vmem>>, vector<1x200xbf16>
    %6 = vector.broadcast %5 : vector<1x200xbf16> to vector<8x200xbf16>
    %7 = arith.addf %4, %6 : vector<8x200xbf16>
    %8 = math.tanh %7 : vector<8x200xbf16>
    %c0_5 = arith.constant 0 : index
    %c0_6 = arith.constant 0 : index
    %9 = vector.load %arg4[%c0_5, %c0_6] : memref<200x200xbf16, #tpu.memory_space<vmem>>, vector<200x200xbf16>
    %cst_7 = arith.constant dense<0.000000e+00> : vector<8x200xf32>
    %10 = tpu.matmul %8, %9, %cst_7 {dimension_numbers = #tpu.dot_dimension_numbers<[1], [0], [0], [1], [0, 0, 1, 1], [], []>} : vector<8x200xbf16>, vector<200x200xbf16>, vector<8x200xf32> -> vector<8x200xf32>
    %11 = arith.truncf %10 : vector<8x200xf32> to vector<8x200xbf16>
    %c0_8 = arith.constant 0 : index
    %c0_9 = arith.constant 0 : index
    %12 = vector.load %arg5[%c0_8, %c0_9] : memref<1x200xbf16, #tpu.memory_space<vmem>>, vector<1x200xbf16>
    %13 = vector.broadcast %12 : vector<1x200xbf16> to vector<8x200xbf16>
    %14 = arith.addf %11, %13 : vector<8x200xbf16>
    %15 = math.tanh %14 : vector<8x200xbf16>
    %c0_10 = arith.constant 0 : index
    %c0_11 = arith.constant 0 : index
    %16 = vector.load %arg6[%c0_10, %c0_11] : memref<200x128xbf16, #tpu.memory_space<vmem>>, vector<200x128xbf16>
    %cst_12 = arith.constant dense<0.000000e+00> : vector<8x128xf32>
    %17 = tpu.matmul %15, %16, %cst_12 {dimension_numbers = #tpu.dot_dimension_numbers<[1], [0], [0], [1], [0, 0, 1, 1], [], []>} : vector<8x200xbf16>, vector<200x128xbf16>, vector<8x128xf32> -> vector<8x128xf32>
    %18 = arith.truncf %17 : vector<8x128xf32> to vector<8x128xbf16>
    %c0_13 = arith.constant 0 : index
    %c0_14 = arith.constant 0 : index
    %19 = vector.load %arg7[%c0_13, %c0_14] : memref<1x128xbf16, #tpu.memory_space<vmem>>, vector<1x128xbf16>
    %20 = vector.broadcast %19 : vector<1x128xbf16> to vector<8x128xbf16>
    %21 = arith.addf %18, %20 : vector<8x128xbf16>
    %22 = arith.negf %21 : vector<8x128xbf16>
    %23 = math.exp %22 : vector<8x128xbf16>
    %cst_15 = arith.constant 1.000000e+00 : bf16
    %24 = vector.broadcast %cst_15 : bf16 to vector<8x128xbf16>
    %25 = arith.addf %24, %23 : vector<8x128xbf16>
    %26 = arith.divf %24, %25 : vector<8x128xbf16>
    %c0_16 = arith.constant 0 : index
    %c0_17 = arith.constant 0 : index
    %27 = vector.load %arg8[%c0_16, %c0_17] : memref<8x128xbf16, #tpu.memory_space<vmem>>, vector<8x128xbf16>
    tpu.vector_store %arg8[%c0_16, %c0_17], %26 {strides = array<i32>} : memref<8x128xbf16, #tpu.memory_space<vmem>>, vector<8x128xbf16>,
    return
  }
  func.func @transform_0(%arg0: i32) -> (i32, i32) {
    %c0_i32 = arith.constant 0 : i32
    %c0_i32_0 = arith.constant 0 : i32
    return %arg0, %c0_i32 : i32, i32
  }
  func.func @transform_1(%arg0: i32) -> (i32, i32) {
    %c0_i32 = arith.constant 0 : i32
    %c0_i32_0 = arith.constant 0 : i32
    %c0_i32_1 = arith.constant 0 : i32
    return %c0_i32, %c0_i32_0 : i32, i32
  }
  func.func @transform_2(%arg0: i32) -> (i32, i32) {
    %c0_i32 = arith.constant 0 : i32
    %c0_i32_0 = arith.constant 0 : i32
    %c0_i32_1 = arith.constant 0 : i32
    return %c0_i32, %c0_i32_0 : i32, i32
  }
  func.func @transform_3(%arg0: i32) -> (i32, i32) {
    %c0_i32 = arith.constant 0 : i32
    %c0_i32_0 = arith.constant 0 : i32
    %c0_i32_1 = arith.constant 0 : i32
    return %c0_i32, %c0_i32_0 : i32, i32
  }
  func.func @transform_4(%arg0: i32) -> (i32, i32) {
    %c0_i32 = arith.constant 0 : i32
    %c0_i32_0 = arith.constant 0 : i32
    %c0_i32_1 = arith.constant 0 : i32
    return %c0_i32, %c0_i32_0 : i32, i32
  }
  func.func @transform_5(%arg0: i32) -> (i32, i32) {
    %c0_i32 = arith.constant 0 : i32
    %c0_i32_0 = arith.constant 0 : i32
    %c0_i32_1 = arith.constant 0 : i32
    return %c0_i32, %c0_i32_0 : i32, i32
  }
  func.func @transform_6(%arg0: i32) -> (i32, i32) {
    %c0_i32 = arith.constant 0 : i32
    %c0_i32_0 = arith.constant 0 : i32
    %c0_i32_1 = arith.constant 0 : i32
    return %c0_i32, %c0_i32_0 : i32, i32
  }
  func.func @transform_7(%arg0: i32) -> (i32, i32) {
    %c0_i32 = arith.constant 0 : i32
    %c0_i32_0 = arith.constant 0 : i32
    return %arg0, %c0_i32 : i32, i32
  }
}

module attributes {stable_mosaic.version = 11 : i64} {
  func.func @_decoder_kernel(%arg0: i32, %arg1: memref<8x32xf32, #tpu.memory_space<vmem>>, %arg2: memref<32x200xbf16, #tpu.memory_space<vmem>>, %arg3: memref<1x200xbf16, #tpu.memory_space<vmem>>, %arg4: memref<200x200xbf16, #tpu.memory_space<vmem>>, %arg5: memref<1x200xbf16, #tpu.memory_space<vmem>>, %arg6: memref<200x128xbf16, #tpu.memory_space<vmem>>, %arg7: memref<1x128xbf16, #tpu.memory_space<vmem>>, %arg8: memref<8x128xbf16, #tpu.memory_space<vmem>>) attributes {dimension_semantics = [#tpu.dimension_semantics<parallel>], iteration_bounds = array<i64: 1>, scalar_prefetch = 0 : i64, scratch_operands = 0 : i64, tpu.core_type = #tpu.core_type<tc>, window_params = [{transform_indices = @transform_0, window_bounds = array<i64: 8, 32>}, {pipeline_mode = #tpu.pipeline_mode<synchronous>, transform_indices = @transform_1, window_bounds = array<i64: 32, 200>}, {pipeline_mode = #tpu.pipeline_mode<synchronous>, transform_indices = @transform_2, window_bounds = array<i64: 1, 200>}, {pipeline_mode = #tpu.pipeline_mode<synchronous>, transform_indices = @transform_3, window_bounds = array<i64: 200, 200>}, {pipeline_mode = #tpu.pipeline_mode<synchronous>, transform_indices = @transform_4, window_bounds = array<i64: 1, 200>}, {pipeline_mode = #tpu.pipeline_mode<synchronous>, transform_indices = @transform_5, window_bounds = array<i64: 200, 128>}, {pipeline_mode = #tpu.pipeline_mode<synchronous>, transform_indices = @transform_6, window_bounds = array<i64: 1, 128>}, {transform_indices = @transform_7, window_bounds = array<i64: 8, 128>}]} {
    %c0 = arith.constant 0 : index
    %c0_0 = arith.constant 0 : index
    %0 = vector.load %arg1[%c0, %c0_0] : memref<8x32xf32, #tpu.memory_space<vmem>>, vector<8x32xf32>
    %1 = arith.truncf %0 : vector<8x32xf32> to vector<8x32xbf16>
    %c0_1 = arith.constant 0 : index
    %c0_2 = arith.constant 0 : index
    %2 = vector.load %arg2[%c0_1, %c0_2] : memref<32x200xbf16, #tpu.memory_space<vmem>>, vector<32x200xbf16>
    %cst = arith.constant dense<0.000000e+00> : vector<8x200xf32>
    %3 = tpu.matmul %1, %2, %cst {dimension_numbers = #tpu.dot_dimension_numbers<[1], [0], [0], [1], [0, 0, 1, 1], [], []>} : vector<8x32xbf16>, vector<32x200xbf16>, vector<8x200xf32> -> vector<8x200xf32>
    %4 = arith.truncf %3 : vector<8x200xf32> to vector<8x200xbf16>
    %c0_3 = arith.constant 0 : index
    %c0_4 = arith.constant 0 : index
    %5 = vector.load %arg3[%c0_3, %c0_4] : memref<1x200xbf16, #tpu.memory_space<vmem>>, vector<1x200xbf16>
    %6 = vector.broadcast %5 : vector<1x200xbf16> to vector<8x200xbf16>
    %7 = arith.addf %4, %6 : vector<8x200xbf16>
    %8 = math.tanh %7 : vector<8x200xbf16>
    %c0_5 = arith.constant 0 : index
    %c0_6 = arith.constant 0 : index
    %9 = vector.load %arg4[%c0_5, %c0_6] : memref<200x200xbf16, #tpu.memory_space<vmem>>, vector<200x200xbf16>
    %cst_7 = arith.constant dense<0.000000e+00> : vector<8x200xf32>
    %10 = tpu.matmul %8, %9, %cst_7 {dimension_numbers = #tpu.dot_dimension_numbers<[1], [0], [0], [1], [0, 0, 1, 1], [], []>} : vector<8x200xbf16>, vector<200x200xbf16>, vector<8x200xf32> -> vector<8x200xf32>
    %11 = arith.truncf %10 : vector<8x200xf32> to vector<8x200xbf16>
    %c0_8 = arith.constant 0 : index
    %c0_9 = arith.constant 0 : index
    %12 = vector.load %arg5[%c0_8, %c0_9] : memref<1x200xbf16, #tpu.memory_space<vmem>>, vector<1x200xbf16>
    %13 = vector.broadcast %12 : vector<1x200xbf16> to vector<8x200xbf16>
    %14 = arith.addf %11, %13 : vector<8x200xbf16>
    %15 = math.tanh %14 : vector<8x200xbf16>
    %c0_10 = arith.constant 0 : index
    %c0_11 = arith.constant 0 : index
    %16 = vector.load %arg6[%c0_10, %c0_11] : memref<200x128xbf16, #tpu.memory_space<vmem>>, vector<200x128xbf16>
    %cst_12 = arith.constant dense<0.000000e+00> : vector<8x128xf32>
    %17 = tpu.matmul %15, %16, %cst_12 {dimension_numbers = #tpu.dot_dimension_numbers<[1], [0], [0], [1], [0, 0, 1, 1], [], []>} : vector<8x200xbf16>, vector<200x128xbf16>, vector<8x128xf32> -> vector<8x128xf32>
    %18 = arith.truncf %17 : vector<8x128xf32> to vector<8x128xbf16>
    %c0_13 = arith.constant 0 : index
    %c0_14 = arith.constant 0 : index
    %19 = vector.load %arg7[%c0_13, %c0_14] : memref<1x128xbf16, #tpu.memory_space<vmem>>, vector<1x128xbf16>
    %20 = vector.broadcast %19 : vector<1x128xbf16> to vector<8x128xbf16>
    %21 = arith.addf %18, %20 : vector<8x128xbf16>
    %22 = arith.negf %21 : vector<8x128xbf16>
    %23 = math.exp %22 : vector<8x128xbf16>
    %cst_15 = arith.constant 1.000000e+00 : bf16
    %24 = vector.broadcast %cst_15 : bf16 to vector<8x128xbf16>
    %25 = arith.addf %24, %23 : vector<8x128xbf16>
    %26 = arith.divf %24, %25 : vector<8x128xbf16>
    %c0_16 = arith.constant 0 : index
    %c0_17 = arith.constant 0 : index
    %27 = vector.load %arg8[%c0_16, %c0_17] : memref<8x128xbf16, #tpu.memory_space<vmem>>, vector<8x128xbf16>
    tpu.vector_store %arg8[%c0_16, %c0_17], %26 {strides = array<i32>} : memref<8x128xbf16, #tpu.memory_space<vmem>>, vector<8x128xbf16>,
    return
  }
  func.func @transform_0(%arg0: i32) -> (i32, i32) {
    %c0_i32 = arith.constant 0 : i32
    %c0_i32_0 = arith.constant 0 : i32
    return %arg0, %c0_i32 : i32, i32
  }
  func.func @transform_1(%arg0: i32) -> (i32, i32) {
    %c0_i32 = arith.constant 0 : i32
    %c0_i32_0 = arith.constant 0 : i32
    %c0_i32_1 = arith.constant 0 : i32
    return %c0_i32, %c0_i32_0 : i32, i32
  }
  func.func @transform_2(%arg0: i32) -> (i32, i32) {
    %c0_i32 = arith.constant 0 : i32
    %c0_i32_0 = arith.constant 0 : i32
    %c0_i32_1 = arith.constant 0 : i32
    return %c0_i32, %c0_i32_0 : i32, i32
  }
  func.func @transform_3(%arg0: i32) -> (i32, i32) {
    %c0_i32 = arith.constant 0 : i32
    %c0_i32_0 = arith.constant 0 : i32
    %c0_i32_1 = arith.constant 0 : i32
    return %c0_i32, %c0_i32_0 : i32, i32
  }
  func.func @transform_4(%arg0: i32) -> (i32, i32) {
    %c0_i32 = arith.constant 0 : i32
    %c0_i32_0 = arith.constant 0 : i32
    %c0_i32_1 = arith.constant 0 : i32
    return %c0_i32, %c0_i32_0 : i32, i32
  }
  func.func @transform_5(%arg0: i32) -> (i32, i32) {
    %c0_i32 = arith.constant 0 : i32
    %c0_i32_0 = arith.constant 0 : i32
    %c0_i32_1 = arith.constant 0 : i32
    return %c0_i32, %c0_i32_0 : i32, i32
  }
  func.func @transform_6(%arg0: i32) -> (i32, i32) {
    %c0_i32 = arith.constant 0 : i32
    %c0_i32_0 = arith.constant 0 : i32
    %c0_i32_1 = arith.constant 0 : i32
    return %c0_i32, %c0_i32_0 : i32, i32
  }
  func.func @transform_7(%arg0: i32) -> (i32, i32) {
    %c0_i32 = arith.constant 0 : i32
    %c0_i32_0 = arith.constant 0 : i32
    return %arg0, %c0_i32 : i32, i32
  }
}

</mosaic_0001>

<llo_original>
// kernel: tpu_custom_call.1
$region0: #{tpu_custom_call.1}
  #allocation0 [shape = 'u32[]', space=smem, size = 0x4, offset = 0x4, fixed_abs, tag = 'smem constant byte address 0x4 - core index']
  #allocation1 [shape = 'u32[144,128]{1,0:T(1,128)}', space=vmem, size = 0x12000, scoped, tag = 'internal scratch']
  %s0 = inlined_call_operand.hbm [shape: f32[8,32], index: 0, kind: input, shape index: {}]
  %s1 = inlined_call_operand.hbm [shape: bf16[32,200], index: 1, kind: input, shape index: {}]
  %s2 = inlined_call_operand.vmem [shape: bf16[1,200], index: 2, kind: input, shape index: {}]
  %s3 = inlined_call_operand.hbm [shape: bf16[200,200], index: 3, kind: input, shape index: {}]
  %s4 = inlined_call_operand.vmem [shape: bf16[1,200], index: 4, kind: input, shape index: {}]
  %s5 = inlined_call_operand.hbm [shape: bf16[200,128], index: 5, kind: input, shape index: {}]
  %s6 = inlined_call_operand.vmem [shape: bf16[1,128], index: 6, kind: input, shape index: {}]
  %s7 = inlined_call_operand.hbm [shape: bf16[8,128], index: 7, kind: output, shape index: {}]
  %s8 = sld [smem:[#allocation0]]
  $region54: #{tpu_custom_call.1} parent=0
    _
  %s10 = ssub.s32 1, %s8
  %s11 = scalar_select 0, %s10, %s8
  $region1: #{tpu_custom_call.1} parent=0
    #allocation2 [shape = 'u8[4096]{0}', space=vmem, size = 0x1000, scoped, tag = 'input window, operand 0, single buffered']
    #allocation3 [shape = 's32[1]{0}', space=sflag, size = 0x4, scoped, tag = 'scoped memory for tpu_custom_call.1']
    #allocation4 [shape = 's32[1]{0}', space=sflag, size = 0x4, scoped, tag = 'scoped memory for tpu_custom_call.1']
    #allocation5 [shape = 'u8[16384]{0}', space=vmem, size = 0x4000, scoped, tag = 'input window, operand 1, single buffered']
    #allocation6 [shape = 's32[1]{0}', space=sflag, size = 0x4, scoped, tag = 'scoped memory for tpu_custom_call.1']
    #allocation7 [shape = 'u8[102400]{0}', space=vmem, size = 0x19000, scoped, tag = 'input window, operand 3, single buffered']
    #allocation8 [shape = 'u8[51200]{0}', space=vmem, size = 0xc800, scoped, tag = 'input window, operand 5, single buffered']
    #allocation9 [shape = 's32[1]{0}', space=sflag, size = 0x4, scoped, tag = 'scoped memory for tpu_custom_call.1']
    #allocation10 [shape = 'u8[2048]{0}', space=vmem, size = 0x800, scoped, tag = 'output window, operand 0, single buffered']
    %12 = vsyncpa [#allocation3], 0
    %13 = vsyncpa [#allocation6], 0
    %14 = vsyncpa [#allocation9], 0
    %15 = vsyncpa [#allocation4], 0
    // Predicated region
    $region2: #{tpu_custom_call.1} parent=1 // pred_check
      _
    $region3: #{tpu_custom_call.1} parent=1 // pred_check_branch
      %17 = sbr.rel (0) target = $region5
    $region4: #{tpu_custom_call.1} parent=1 // pred_region
      %s19 = ssub.s32 128, 128
      %20 = vsyncadd [#allocation3], %s19
      %s22 = sshll.u32 [#allocation2], 4
      %s23 = int_to_ptr.vmem [resolvable:$true] %s22
      %25 = dma.hbm_to_vmem [thread:$0]  %s0, 128, %s23, [#allocation3]
    $region5: #{tpu_custom_call.1} parent=1 // pred_fallthru
      _
    // Predicated region
    $region6: #{tpu_custom_call.1} parent=1 // pred_check
      _
    $region7: #{tpu_custom_call.1} parent=1 // pred_check_branch
      %27 = sbr.rel (0) target = $region9
    $region8: #{tpu_custom_call.1} parent=1 // pred_region
      %s29 = ssub.s32 512, 512
      %30 = vsyncadd [#allocation6], %s29
      %s31 = sshll.u32 [#allocation5], 4
      %s32 = int_to_ptr.vmem [resolvable:$true] %s31
      %37 = dma.hbm_to_vmem [thread:$0]  %s1, 512, %s32, [#allocation6], 128, 128, 8
    $region9: #{tpu_custom_call.1} parent=1 // pred_fallthru
      _
    // Predicated region
    $region10: #{tpu_custom_call.1} parent=1 // pred_check
      _
    $region11: #{tpu_custom_call.1} parent=1 // pred_check_branch
      %39 = sbr.rel (0) target = $region13
    $region12: #{tpu_custom_call.1} parent=1 // pred_region
      _
    $region13: #{tpu_custom_call.1} parent=1 // pred_fallthru
      _
    // Predicated region
    $region14: #{tpu_custom_call.1} parent=1 // pred_check
      _
    $region15: #{tpu_custom_call.1} parent=1 // pred_check_branch
      %41 = sbr.rel (0) target = $region17
    $region16: #{tpu_custom_call.1} parent=1 // pred_region
      %s43 = ssub.s32 3200, 3200
      %44 = vsyncadd [#allocation6], %s43
      %s45 = sshll.u32 [#allocation7], 4
      %s46 = int_to_ptr.vmem [resolvable:$true] %s45
      %51 = dma.hbm_to_vmem [thread:$0]  %s3, 3200, %s46, [#allocation6], 128, 128, 8
    $region17: #{tpu_custom_call.1} parent=1 // pred_fallthru
      _
    // Predicated region
    $region18: #{tpu_custom_call.1} parent=1 // pred_check
      _
    $region19: #{tpu_custom_call.1} parent=1 // pred_check_branch
      %53 = sbr.rel (0) target = $region21
    $region20: #{tpu_custom_call.1} parent=1 // pred_region
      _
    $region21: #{tpu_custom_call.1} parent=1 // pred_fallthru
      _
    // Predicated region
    $region22: #{tpu_custom_call.1} parent=1 // pred_check
      _
    $region23: #{tpu_custom_call.1} parent=1 // pred_check_branch
      %55 = sbr.rel (0) target = $region25
    $region24: #{tpu_custom_call.1} parent=1 // pred_region
      %s57 = ssub.s32 1600, 1600
      %58 = vsyncadd [#allocation9], %s57
      %s59 = sshll.u32 [#allocation8], 4
      %s60 = int_to_ptr.vmem [resolvable:$true] %s59
      %65 = dma.hbm_to_vmem [thread:$0]  %s5, 1600, %s60, [#allocation9], 64, 64, 4
    $region25: #{tpu_custom_call.1} parent=1 // pred_fallthru
      _
    // Predicated region
    $region26: #{tpu_custom_call.1} parent=1 // pred_check
      _
    $region27: #{tpu_custom_call.1} parent=1 // pred_check_branch
      %67 = sbr.rel (0) target = $region29
    $region28: #{tpu_custom_call.1} parent=1 // pred_region
      _
    $region29: #{tpu_custom_call.1} parent=1 // pred_fallthru
      _
    // Predicated region
    $region30: #{tpu_custom_call.1} parent=1 // pred_check
      _
    $region31: #{tpu_custom_call.1} parent=1 // pred_check_branch
      %69 = sbr.rel (0) target = $region33
    $region32: #{tpu_custom_call.1} parent=1 // pred_region
      %70 = dma.done [#allocation3], 128
    $region33: #{tpu_custom_call.1} parent=1 // pred_fallthru
      _
    // Predicated region
    $region34: #{tpu_custom_call.1} parent=1 // pred_check
      _
    $region35: #{tpu_custom_call.1} parent=1 // pred_check_branch
      %72 = sbr.rel (0) target = $region37
    $region36: #{tpu_custom_call.1} parent=1 // pred_region
      %73 = dma.done [#allocation6], 512
    $region37: #{tpu_custom_call.1} parent=1 // pred_fallthru
      _
    // Predicated region
    $region38: #{tpu_custom_call.1} parent=1 // pred_check
      _
    $region39: #{tpu_custom_call.1} parent=1 // pred_check_branch
      %75 = sbr.rel (0) target = $region41
    $region40: #{tpu_custom_call.1} parent=1 // pred_region
      %76 = dma.done [#allocation6], 3200
    $region41: #{tpu_custom_call.1} parent=1 // pred_fallthru
      _
    // Predicated region
    $region42: #{tpu_custom_call.1} parent=1 // pred_check
      _
    $region43: #{tpu_custom_call.1} parent=1 // pred_check_branch
      %78 = sbr.rel (0) target = $region45
    $region44: #{tpu_custom_call.1} parent=1 // pred_region
      %79 = dma.done [#allocation9], 1600
    $region45: #{tpu_custom_call.1} parent=1 // pred_fallthru
      _
    %v82 = vld [vmem:[#allocation2] sm:$0xff]
    %v83 = vpack.c.bf16 %v82, %v82
    %v84 = vld [vmem:[#allocation5] sm:$0xff]
    %v85 = vld [vmem:[#allocation5 + $0x8] sm:$0xff]
    %v86 = vld [vmem:[#allocation5 + $0x10] sm:$0xff]
    %v87 = vld [vmem:[#allocation5 + $0x18] sm:$0xff]
    %v92 = vunpack.c.l.b16 %v84
    %v93 = vunpack.c.h.b16 %v84
    %v94 = vunpack.c.l.b16 %v85
    %v95 = vunpack.c.h.b16 %v85
    %v96 = vunpack.c.l.b16 %v86
    %v97 = vunpack.c.h.b16 %v86
    %v98 = vunpack.c.l.b16 %v87
    %v99 = vunpack.c.h.b16 %v87
    %v100 = vpack.c.b16 %v94, %v92
    %v101 = vpack.c.b16 %v95, %v93
    %v102 = vpack.c.b16 %v98, %v96
    %v103 = vpack.c.b16 %v99, %v97
    %vm108 = vcmask 261120
    %v110 = vsel %vm108, %v83, 0
    %112 = vmatprep.subr.bf16.mxu0 %v101
    %113 = vmatpush1.bf16.msra.mxu0 %v100
    %114 = vmatprep.subr.bf16.mxu0 %v103
    %115 = vmatpush1.bf16.msra.mxu0 %v102
    %116 = vmatprep.subr.bf16.mxu0 0
    %117 = vmatpush1.bf16.msra.mxu0 0
    %118 = vmatprep.subr.bf16.mxu0 0
    %119 = vmatpush1.bf16.msra.mxu0 0
    %120 = vmatprep.subr.bf16.mxu0 0
    %121 = vmatpush1.bf16.msra.mxu0 0
    %122 = vmatprep.subr.bf16.mxu0 0
    %123 = vmatpush1.bf16.msra.mxu0 0
    %124 = vmatprep.subr.bf16.mxu0 0
    %125 = vmatpush1.bf16.msra.mxu0 0
    %126 = vmatprep.subr.bf16.mxu0 0
    %127 = vmatpush1.bf16.msra.mxu0 0
    %128 = vmatprep.subr.bf16.mxu0 0
    %129 = vmatpush1.bf16.msra.mxu0 0
    %130 = vmatprep.subr.bf16.mxu0 0
    %131 = vmatpush1.bf16.msra.mxu0 0
    %132 = vmatprep.subr.bf16.mxu0 0
    %133 = vmatpush1.bf16.msra.mxu0 0
    %134 = vmatprep.subr.bf16.mxu0 0
    %135 = vmatpush1.bf16.msra.mxu0 0
    %136 = vmatprep.subr.bf16.mxu0 0
    %137 = vmatpush1.bf16.msra.mxu0 0
    %138 = vmatprep.subr.bf16.mxu0 0
    %139 = vmatpush1.bf16.msra.mxu0 0
    %140 = vmatprep.subr.bf16.mxu0 0
    %141 = vmatpush1.bf16.msra.mxu0 0
    %142 = vmatprep.subr.bf16.mxu0 0
    %143 = vmatpush1.bf16.msra.mxu0 0
    %144 = vmatprep.mubr.bf16.mxu0 0
    %145 = vmatmul.mubr.bf16.gmra.mrb[0].mxu0 %v110
    %v146 = vpop.f32.mrb[0].mxu0
    %v147 = vadd.f32 0.0, %v146
    %v148 = vpop.f32.mrb[0].mxu0
    %v149 = vadd.f32 0.0, %v148
    %v150 = vpop.f32.mrb[0].mxu0
    %v151 = vpop.f32.mrb[0].mxu0
    %152 = vdwg.mxu0
    %v153 = vpack.c.bf16 %v147, %v147
    %v154 = vpack.c.bf16 %v149, %v149
    %v155 = vld [vmem:[%s2] sm:$0x3]
    %v158 = vunpack.c.l.s4 1966171168
    %v159 = vunpack.c.0.s8 %v158
    %v160 = vlaneseq
    %v161 = vshrl.u32 %v160, 7
    %v162 = vsub.s32 %v159, %v161
    %v163 = vrot.slane %v155, %v162
    %v164 = vcombine.high %v163, %v163
    %v166 = vunpack.c.l.s4 1966171168
    %v167 = vunpack.c.0.s8 %v166
    %v168 = vlaneseq
    %v169 = vshrl.u32 %v168, 7
    %v170 = vsub.s32 %v167, %v169
    %v171 = vrot.slane %v163, %v170
    %v173 = vunpack.c.l.s4 1966171168
    %v174 = vunpack.c.0.s8 %v173
    %v175 = vlaneseq
    %v176 = vshrl.u32 %v175, 7
    %v177 = vsub.s32 %v174, %v176
    %v178 = vrot.slane %v164, %v177
    %v180 = vpack.i.b16 %v171, %v171
    %v182 = vlaneseq
    %v183 = vshrl.u32 %v182, 7
    %v184 = vsub.s32 0, %v183
    %v185 = vrot.slane %v180, %v184
    %v187 = vpack.i.b16 %v178, %v178
    %v189 = vlaneseq
    %v190 = vshrl.u32 %v189, 7
    %v191 = vsub.s32 0, %v190
    %v192 = vrot.slane %v187, %v191
    %v193 = vadd.bf16 %v153, %v185
    %v194 = vadd.bf16 %v154, %v192
    %v195 = vtanh.bf16.pop %v193
    %v196 = vtanh.bf16.pop %v194
    %v197 = vld [vmem:[#allocation7] sm:$0xff]
    %v198 = vld [vmem:[#allocation7 + $0x8] sm:$0xff]
    %v199 = vld [vmem:[#allocation7 + $0x10] sm:$0xff]
    %v200 = vld [vmem:[#allocation7 + $0x18] sm:$0xff]
    %v201 = vld [vmem:[#allocation7 + $0x20] sm:$0xff]
    %v202 = vld [vmem:[#allocation7 + $0x28] sm:$0xff]
    %v203 = vld [vmem:[#allocation7 + $0x30] sm:$0xff]
    %v204 = vld [vmem:[#allocation7 + $0x38] sm:$0xff]
    %v205 = vld [vmem:[#allocation7 + $0x40] sm:$0xff]
    %v206 = vld [vmem:[#allocation7 + $0x48] sm:$0xff]
    %v207 = vld [vmem:[#allocation7 + $0x50] sm:$0xff]
    %v208 = vld [vmem:[#allocation7 + $0x58] sm:$0xff]
    %v209 = vld [vmem:[#allocation7 + $0x60] sm:$0xff]
    %v210 = vld [vmem:[#allocation7 + $0x68] sm:$0xff]
    %v211 = vld [vmem:[#allocation7 + $0x70] sm:$0xff]
    %v212 = vld [vmem:[#allocation7 + $0x78] sm:$0xff]
    %v213 = vld [vmem:[#allocation7 + $0x80] sm:$0xff]
    %v214 = vld [vmem:[#allocation7 + $0x88] sm:$0xff]
    %v215 = vld [vmem:[#allocation7 + $0x90] sm:$0xff]
    %v216 = vld [vmem:[#allocation7 + $0x98] sm:$0xff]
    %v217 = vld [vmem:[#allocation7 + $0xa0] sm:$0xff]
    %v218 = vld [vmem:[#allocation7 + $0xa8] sm:$0xff]
    %v219 = vld [vmem:[#allocation7 + $0xb0] sm:$0xff]
    %v220 = vld [vmem:[#allocation7 + $0xb8] sm:$0xff]
    %v221 = vld [vmem:[#allocation7 + $0xc0] sm:$0xff]
    %v247 = vunpack.c.l.b16 %v197
    %v248 = vunpack.c.h.b16 %v197
    %v249 = vunpack.c.l.b16 %v198
    %v250 = vunpack.c.h.b16 %v198
    %v251 = vunpack.c.l.b16 %v199
    %v252 = vunpack.c.h.b16 %v199
    %v253 = vunpack.c.l.b16 %v200
    %v254 = vunpack.c.h.b16 %v200
    %v255 = vunpack.c.l.b16 %v201
    %v256 = vunpack.c.h.b16 %v201
    %v257 = vunpack.c.l.b16 %v202
    %v258 = vunpack.c.h.b16 %v202
    %v259 = vunpack.c.l.b16 %v203
    %v260 = vunpack.c.h.b16 %v203
    %v261 = vunpack.c.l.b16 %v204
    %v262 = vunpack.c.h.b16 %v204
    %v263 = vunpack.c.l.b16 %v205
    %v264 = vunpack.c.h.b16 %v205
    %v265 = vunpack.c.l.b16 %v206
    %v266 = vunpack.c.h.b16 %v206
    %v267 = vunpack.c.l.b16 %v207
    %v268 = vunpack.c.h.b16 %v207
    %v269 = vunpack.c.l.b16 %v208
    %v270 = vunpack.c.h.b16 %v208
    %v271 = vunpack.c.l.b16 %v209
    %v272 = vunpack.c.h.b16 %v209
    %v273 = vunpack.c.l.b16 %v210
    %v274 = vunpack.c.h.b16 %v210
    %v275 = vunpack.c.l.b16 %v211
    %v276 = vunpack.c.h.b16 %v211
    %v277 = vunpack.c.l.b16 %v212
    %v278 = vunpack.c.h.b16 %v212
    %v279 = vunpack.c.l.b16 %v213
    %v280 = vunpack.c.h.b16 %v213
    %v281 = vunpack.c.l.b16 %v214
    %v282 = vunpack.c.h.b16 %v214
    %v283 = vunpack.c.l.b16 %v215
    %v284 = vunpack.c.h.b16 %v215
    %v285 = vunpack.c.l.b16 %v216
    %v286 = vunpack.c.h.b16 %v216
    %v287 = vunpack.c.l.b16 %v217
    %v288 = vunpack.c.h.b16 %v217
    %v289 = vunpack.c.l.b16 %v218
    %v290 = vunpack.c.h.b16 %v218
    %v291 = vunpack.c.l.b16 %v219
    %v292 = vunpack.c.h.b16 %v219
    %v293 = vunpack.c.l.b16 %v220
    %v294 = vunpack.c.h.b16 %v220
    %v295 = vunpack.c.l.b16 %v221
    %v296 = vunpack.c.h.b16 %v221
    %v297 = vpack.c.b16 %v249, %v247
    %v298 = vpack.c.b16 %v250, %v248
    %v299 = vpack.c.b16 %v253, %v251
    %v300 = vpack.c.b16 %v254, %v252
    %v301 = vpack.c.b16 %v257, %v255
    %v302 = vpack.c.b16 %v258, %v256
    %v303 = vpack.c.b16 %v261, %v259
    %v304 = vpack.c.b16 %v262, %v260
    %v305 = vpack.c.b16 %v265, %v263
    %v306 = vpack.c.b16 %v266, %v264
    %v307 = vpack.c.b16 %v269, %v267
    %v308 = vpack.c.b16 %v270, %v268
    %v309 = vpack.c.b16 %v273, %v271
    %v310 = vpack.c.b16 %v274, %v272
    %v311 = vpack.c.b16 %v277, %v275
    %v312 = vpack.c.b16 %v278, %v276
    %v313 = vpack.c.b16 %v281, %v279
    %v314 = vpack.c.b16 %v282, %v280
    %v315 = vpack.c.b16 %v285, %v283
    %v316 = vpack.c.b16 %v286, %v284
    %v317 = vpack.c.b16 %v289, %v287
    %v318 = vpack.c.b16 %v290, %v288
    %v319 = vpack.c.b16 %v293, %v291
    %v320 = vpack.c.b16 %v294, %v292
    %v321 = vpack.c.b16 %v295, %v295
    %v322 = vpack.c.b16 %v296, %v296
    %vm347 = vcmask 588800
    %v349 = vsel %vm347, %v196, 0
    %vm351 = vcmask 1043456
    %v353 = vsel %vm351, %v321, 0
    %v356 = vsel %vm351, %v322, 0
    %358 = vmatprep.subr.bf16.mxu0 %v298
    %359 = vmatpush1.bf16.msra.mxu0 %v297
    %360 = vmatprep.subr.bf16.mxu0 %v300
    %361 = vmatpush1.bf16.msra.mxu0 %v299
    %362 = vmatprep.subr.bf16.mxu0 %v302
    %363 = vmatpush1.bf16.msra.mxu0 %v301
    %364 = vmatprep.subr.bf16.mxu0 %v304
    %365 = vmatpush1.bf16.msra.mxu0 %v303
    %366 = vmatprep.subr.bf16.mxu0 %v306
    %367 = vmatpush1.bf16.msra.mxu0 %v305
    %368 = vmatprep.subr.bf16.mxu0 %v308
    %369 = vmatpush1.bf16.msra.mxu0 %v307
    %370 = vmatprep.subr.bf16.mxu0 %v310
    %371 = vmatpush1.bf16.msra.mxu0 %v309
    %372 = vmatprep.subr.bf16.mxu0 %v312
    %373 = vmatpush1.bf16.msra.mxu0 %v311
    %374 = vmatprep.subr.bf16.mxu0 %v314
    %375 = vmatpush1.bf16.msra.mxu0 %v313
    %376 = vmatprep.subr.bf16.mxu0 %v316
    %377 = vmatpush1.bf16.msra.mxu0 %v315
    %378 = vmatprep.subr.bf16.mxu0 %v318
    %379 = vmatpush1.bf16.msra.mxu0 %v317
    %380 = vmatprep.subr.bf16.mxu0 %v320
    %381 = vmatpush1.bf16.msra.mxu0 %v319
    %382 = vmatprep.subr.bf16.mxu0 %v356
    %383 = vmatpush1.bf16.msra.mxu0 %v353
    %384 = vmatprep.subr.bf16.mxu0 0
    %385 = vmatpush1.bf16.msra.mxu0 0
    %386 = vmatprep.subr.bf16.mxu0 0
    %387 = vmatpush1.bf16.msra.mxu0 0
    %388 = vmatprep.subr.bf16.mxu0 0
    %389 = vmatpush1.bf16.msra.mxu0 0
    %390 = vmatprep.mubr.bf16.mxu0 %v349
    %391 = vmatmul.mubr.bf16.gmra.mrb[0].mxu0 %v195
    %v392 = vpop.f32.mrb[0].mxu0
    %v393 = vadd.f32 0.0, %v392
    %v394 = vpop.f32.mrb[0].mxu0
    %v395 = vadd.f32 0.0, %v394
    %v396 = vpop.f32.mrb[0].mxu0
    %v397 = vpop.f32.mrb[0].mxu0
    %398 = vdwg.mxu0
    %v399 = vpack.c.bf16 %v393, %v393
    %v400 = vpack.c.bf16 %v395, %v395
    %v401 = vld [vmem:[%s4] sm:$0x3]
    %v404 = vunpack.c.l.s4 1966171168
    %v405 = vunpack.c.0.s8 %v404
    %v406 = vlaneseq
    %v407 = vshrl.u32 %v406, 7
    %v408 = vsub.s32 %v405, %v407
    %v409 = vrot.slane %v401, %v408
    %v410 = vcombine.high %v409, %v409
    %v412 = vunpack.c.l.s4 1966171168
    %v413 = vunpack.c.0.s8 %v412
    %v414 = vlaneseq
    %v415 = vshrl.u32 %v414, 7
    %v416 = vsub.s32 %v413, %v415
    %v417 = vrot.slane %v409, %v416
    %v419 = vunpack.c.l.s4 1966171168
    %v420 = vunpack.c.0.s8 %v419
    %v421 = vlaneseq
    %v422 = vshrl.u32 %v421, 7
    %v423 = vsub.s32 %v420, %v422
    %v424 = vrot.slane %v410, %v423
    %v426 = vpack.i.b16 %v417, %v417
    %v428 = vlaneseq
    %v429 = vshrl.u32 %v428, 7
    %v430 = vsub.s32 0, %v429
    %v431 = vrot.slane %v426, %v430
    %v433 = vpack.i.b16 %v424, %v424
    %v435 = vlaneseq
    %v436 = vshrl.u32 %v435, 7
    %v437 = vsub.s32 0, %v436
    %v438 = vrot.slane %v433, %v437
    %v439 = vadd.bf16 %v399, %v431
    %v440 = vadd.bf16 %v400, %v438
    %v441 = vtanh.bf16.pop %v439
    %v442 = vtanh.bf16.pop %v440
    %v443 = vld [vmem:[#allocation8] sm:$0xf]
    %v444 = vld [vmem:[#allocation8 + $0x4] sm:$0xf]
    %v445 = vld [vmem:[#allocation8 + $0x8] sm:$0xf]
    %v446 = vld [vmem:[#allocation8 + $0xc] sm:$0xf]
    %v447 = vld [vmem:[#allocation8 + $0x10] sm:$0xf]
    %v448 = vld [vmem:[#allocation8 + $0x14] sm:$0xf]
    %v449 = vld [vmem:[#allocation8 + $0x18] sm:$0xf]
    %v450 = vld [vmem:[#allocation8 + $0x1c] sm:$0xf]
    %v451 = vld [vmem:[#allocation8 + $0x20] sm:$0xf]
    %v452 = vld [vmem:[#allocation8 + $0x24] sm:$0xf]
    %v453 = vld [vmem:[#allocation8 + $0x28] sm:$0xf]
    %v454 = vld [vmem:[#allocation8 + $0x2c] sm:$0xf]
    %v455 = vld [vmem:[#allocation8 + $0x30] sm:$0xf]
    %v456 = vld [vmem:[#allocation8 + $0x34] sm:$0xf]
    %v457 = vld [vmem:[#allocation8 + $0x38] sm:$0xf]
    %v458 = vld [vmem:[#allocation8 + $0x3c] sm:$0xf]
    %v459 = vld [vmem:[#allocation8 + $0x40] sm:$0xf]
    %v460 = vld [vmem:[#allocation8 + $0x44] sm:$0xf]
    %v461 = vld [vmem:[#allocation8 + $0x48] sm:$0xf]
    %v462 = vld [vmem:[#allocation8 + $0x4c] sm:$0xf]
    %v463 = vld [vmem:[#allocation8 + $0x50] sm:$0xf]
    %v464 = vld [vmem:[#allocation8 + $0x54] sm:$0xf]
    %v465 = vld [vmem:[#allocation8 + $0x58] sm:$0xf]
    %v466 = vld [vmem:[#allocation8 + $0x5c] sm:$0xf]
    %v467 = vld [vmem:[#allocation8 + $0x60] sm:$0xf]
    %v493 = vunpack.c.l.b16 %v443
    %v494 = vunpack.c.l.b16 %v444
    %v495 = vunpack.c.l.b16 %v445
    %v496 = vunpack.c.l.b16 %v446
    %v497 = vunpack.c.l.b16 %v447
    %v498 = vunpack.c.l.b16 %v448
    %v499 = vunpack.c.l.b16 %v449
    %v500 = vunpack.c.l.b16 %v450
    %v501 = vunpack.c.l.b16 %v451
    %v502 = vunpack.c.l.b16 %v452
    %v503 = vunpack.c.l.b16 %v453
    %v504 = vunpack.c.l.b16 %v454
    %v505 = vunpack.c.l.b16 %v455
    %v506 = vunpack.c.l.b16 %v456
    %v507 = vunpack.c.l.b16 %v457
    %v508 = vunpack.c.l.b16 %v458
    %v509 = vunpack.c.l.b16 %v459
    %v510 = vunpack.c.l.b16 %v460
    %v511 = vunpack.c.l.b16 %v461
    %v512 = vunpack.c.l.b16 %v462
    %v513 = vunpack.c.l.b16 %v463
    %v514 = vunpack.c.l.b16 %v464
    %v515 = vunpack.c.l.b16 %v465
    %v516 = vunpack.c.l.b16 %v466
    %v517 = vunpack.c.l.b16 %v467
    %v518 = vpack.c.b16 %v494, %v493
    %v519 = vpack.c.b16 %v496, %v495
    %v520 = vpack.c.b16 %v498, %v497
    %v521 = vpack.c.b16 %v500, %v499
    %v522 = vpack.c.b16 %v502, %v501
    %v523 = vpack.c.b16 %v504, %v503
    %v524 = vpack.c.b16 %v506, %v505
    %v525 = vpack.c.b16 %v508, %v507
    %v526 = vpack.c.b16 %v510, %v509
    %v527 = vpack.c.b16 %v512, %v511
    %v528 = vpack.c.b16 %v514, %v513
    %v529 = vpack.c.b16 %v516, %v515
    %v530 = vpack.c.b16 %v517, %v517
    %v544 = vsel %vm347, %v442, 0
    %v547 = vsel %vm351, %v530, 0
    %549 = vmatprep.subr.bf16.mxu0 0
    %550 = vmatpush1.bf16.msra.mxu0 %v518
    %551 = vmatprep.subr.bf16.mxu0 0
    %552 = vmatpush1.bf16.msra.mxu0 %v519
    %553 = vmatprep.subr.bf16.mxu0 0
    %554 = vmatpush1.bf16.msra.mxu0 %v520
    %555 = vmatprep.subr.bf16.mxu0 0
    %556 = vmatpush1.bf16.msra.mxu0 %v521
    %557 = vmatprep.subr.bf16.mxu0 0
    %558 = vmatpush1.bf16.msra.mxu0 %v522
    %559 = vmatprep.subr.bf16.mxu0 0
    %560 = vmatpush1.bf16.msra.mxu0 %v523
    %561 = vmatprep.subr.bf16.mxu0 0
    %562 = vmatpush1.bf16.msra.mxu0 %v524
    %563 = vmatprep.subr.bf16.mxu0 0
    %564 = vmatpush1.bf16.msra.mxu0 %v525
    %565 = vmatprep.subr.bf16.mxu0 0
    %566 = vmatpush1.bf16.msra.mxu0 %v526
    %567 = vmatprep.subr.bf16.mxu0 0
    %568 = vmatpush1.bf16.msra.mxu0 %v527
    %569 = vmatprep.subr.bf16.mxu0 0
    %570 = vmatpush1.bf16.msra.mxu0 %v528
    %571 = vmatprep.subr.bf16.mxu0 0
    %572 = vmatpush1.bf16.msra.mxu0 %v529
    %573 = vmatprep.subr.bf16.mxu0 0
    %574 = vmatpush1.bf16.msra.mxu0 %v547
    %575 = vmatprep.subr.bf16.mxu0 0
    %576 = vmatpush1.bf16.msra.mxu0 0
    %577 = vmatprep.subr.bf16.mxu0 0
    %578 = vmatpush1.bf16.msra.mxu0 0
    %579 = vmatprep.subr.bf16.mxu0 0
    %580 = vmatpush1.bf16.msra.mxu0 0
    %581 = vmatprep.mubr.bf16.mxu0 %v544
    %582 = vmatmul.mubr.bf16.gmra.mrb[0].mxu0 %v441
    %v583 = vpop.f32.mrb[0].mxu0
    %v584 = vadd.f32 0.0, %v583
    %v585 = vpop.f32.mrb[0].mxu0
    %v586 = vpop.f32.mrb[0].mxu0
    %v587 = vpop.f32.mrb[0].mxu0
    %588 = vdwg.mxu0
    %v589 = vpack.c.bf16 %v584, %v584
    %v590 = vld [vmem:[%s6] sm:$0x1]
    %v592 = vpack.i.b16 %v590, %v590
    %v594 = vlaneseq
    %v595 = vshrl.u32 %v594, 7
    %v596 = vsub.s32 0, %v595
    %v597 = vrot.slane %v592, %v596
    %v598 = vadd.bf16 %v589, %v597
    %v599 = vxor.u32 %v598, 2147516416
    %v601 = vmul.bf16 %v599, 1069105081
    %v602 = vpow.bf16.pop %v601
    %v603 = vadd.bf16 %v602, 1065369472
    %v604 = vrcp.bf16.pop %v603
    %v605 = vmul.bf16 1065369472, %v604
    %606 = vst [vmem:[#allocation10] sm:$0xf] %v605
    // Predicated region
    $region46: #{tpu_custom_call.1} parent=1 // pred_check
      _
    $region47: #{tpu_custom_call.1} parent=1 // pred_check_branch
      %608 = sbr.rel (0) target = $region49
    $region48: #{tpu_custom_call.1} parent=1 // pred_region
      %s610 = ssub.s32 64, 64
      %611 = vsyncadd [#allocation4], %s610
      %s613 = sshll.u32 [#allocation10], 4
      %s614 = int_to_ptr.vmem [resolvable:$true] %s613
      %616 = dma.vmem_to_hbm [thread:$0]  %s614, 64, %s7, [#allocation4]
    $region49: #{tpu_custom_call.1} parent=1 // pred_fallthru
      _
    // Predicated region
    $region50: #{tpu_custom_call.1} parent=1 // pred_check
      _
    $region51: #{tpu_custom_call.1} parent=1 // pred_check_branch
      %618 = sbr.rel (0) target = $region53
    $region52: #{tpu_custom_call.1} parent=1 // pred_region
      %619 = dma.done [#allocation4], 64
    $region53: #{tpu_custom_call.1} parent=1 // pred_fallthru
      _
    %620 = vsyncpa [#allocation3], 1
    %621 = vsyncpa [#allocation6], 1
    %622 = vsyncpa [#allocation9], 1
    %623 = vsyncpa [#allocation4], 1

// kernel: tpu_custom_call.1
$region0: #{tpu_custom_call.1}
  #allocation0 [shape = 'u32[]', space=smem, size = 0x4, offset = 0x4, fixed_abs, tag = 'smem constant byte address 0x4 - core index']
  #allocation1 [shape = 'u32[144,128]{1,0:T(1,128)}', space=vmem, size = 0x12000, scoped, tag = 'internal scratch']
  %s0 = inlined_call_operand.hbm [shape: f32[8,32], index: 0, kind: input, shape index: {}]
  %s1 = inlined_call_operand.hbm [shape: bf16[32,200], index: 1, kind: input, shape index: {}]
  %s2 = inlined_call_operand.vmem [shape: bf16[1,200], index: 2, kind: input, shape index: {}]
  %s3 = inlined_call_operand.hbm [shape: bf16[200,200], index: 3, kind: input, shape index: {}]
  %s4 = inlined_call_operand.vmem [shape: bf16[1,200], index: 4, kind: input, shape index: {}]
  %s5 = inlined_call_operand.hbm [shape: bf16[200,128], index: 5, kind: input, shape index: {}]
  %s6 = inlined_call_operand.vmem [shape: bf16[1,128], index: 6, kind: input, shape index: {}]
  %s7 = inlined_call_operand.hbm [shape: bf16[8,128], index: 7, kind: output, shape index: {}]
  %s8 = sld [smem:[#allocation0]]
  $region54: #{tpu_custom_call.1} parent=0
    _
  %s10 = ssub.s32 1, %s8
  %s11 = scalar_select 0, %s10, %s8
  $region1: #{tpu_custom_call.1} parent=0
    #allocation2 [shape = 'u8[4096]{0}', space=vmem, size = 0x1000, scoped, tag = 'input window, operand 0, single buffered']
    #allocation3 [shape = 's32[1]{0}', space=sflag, size = 0x4, scoped, tag = 'scoped memory for tpu_custom_call.1']
    #allocation4 [shape = 's32[1]{0}', space=sflag, size = 0x4, scoped, tag = 'scoped memory for tpu_custom_call.1']
    #allocation5 [shape = 'u8[16384]{0}', space=vmem, size = 0x4000, scoped, tag = 'input window, operand 1, single buffered']
    #allocation6 [shape = 's32[1]{0}', space=sflag, size = 0x4, scoped, tag = 'scoped memory for tpu_custom_call.1']
    #allocation7 [shape = 'u8[102400]{0}', space=vmem, size = 0x19000, scoped, tag = 'input window, operand 3, single buffered']
    #allocation8 [shape = 'u8[51200]{0}', space=vmem, size = 0xc800, scoped, tag = 'input window, operand 5, single buffered']
    #allocation9 [shape = 's32[1]{0}', space=sflag, size = 0x4, scoped, tag = 'scoped memory for tpu_custom_call.1']
    #allocation10 [shape = 'u8[2048]{0}', space=vmem, size = 0x800, scoped, tag = 'output window, operand 0, single buffered']
    %12 = vsyncpa [#allocation3], 0
    %13 = vsyncpa [#allocation6], 0
    %14 = vsyncpa [#allocation9], 0
    %15 = vsyncpa [#allocation4], 0
    // Predicated region
    $region2: #{tpu_custom_call.1} parent=1 // pred_check
      _
    $region3: #{tpu_custom_call.1} parent=1 // pred_check_branch
      %17 = sbr.rel (0) target = $region5
    $region4: #{tpu_custom_call.1} parent=1 // pred_region
      %s19 = ssub.s32 128, 128
      %20 = vsyncadd [#allocation3], %s19
      %s22 = sshll.u32 [#allocation2], 4
      %s23 = int_to_ptr.vmem [resolvable:$true] %s22
      %25 = dma.hbm_to_vmem [thread:$0]  %s0, 128, %s23, [#allocation3]
    $region5: #{tpu_custom_call.1} parent=1 // pred_fallthru
      _
    // Predicated region
    $region6: #{tpu_custom_call.1} parent=1 // pred_check
      _
    $region7: #{tpu_custom_call.1} parent=1 // pred_check_branch
      %27 = sbr.rel (0) target = $region9
    $region8: #{tpu_custom_call.1} parent=1 // pred_region
      %s29 = ssub.s32 512, 512
      %30 = vsyncadd [#allocation6], %s29
      %s31 = sshll.u32 [#allocation5], 4
      %s32 = int_to_ptr.vmem [resolvable:$true] %s31
      %37 = dma.hbm_to_vmem [thread:$0]  %s1, 512, %s32, [#allocation6], 128, 128, 8
    $region9: #{tpu_custom_call.1} parent=1 // pred_fallthru
      _
    // Predicated region
    $region10: #{tpu_custom_call.1} parent=1 // pred_check
      _
    $region11: #{tpu_custom_call.1} parent=1 // pred_check_branch
      %39 = sbr.rel (0) target = $region13
    $region12: #{tpu_custom_call.1} parent=1 // pred_region
      _
    $region13: #{tpu_custom_call.1} parent=1 // pred_fallthru
      _
    // Predicated region
    $region14: #{tpu_custom_call.1} parent=1 // pred_check
      _
    $region15: #{tpu_custom_call.1} parent=1 // pred_check_branch
      %41 = sbr.rel (0) target = $region17
    $region16: #{tpu_custom_call.1} parent=1 // pred_region
      %s43 = ssub.s32 3200, 3200
      %44 = vsyncadd [#allocation6], %s43
      %s45 = sshll.u32 [#allocation7], 4
      %s46 = int_to_ptr.vmem [resolvable:$true] %s45
      %51 = dma.hbm_to_vmem [thread:$0]  %s3, 3200, %s46, [#allocation6], 128, 128, 8
    $region17: #{tpu_custom_call.1} parent=1 // pred_fallthru
      _
    // Predicated region
    $region18: #{tpu_custom_call.1} parent=1 // pred_check
      _
    $region19: #{tpu_custom_call.1} parent=1 // pred_check_branch
      %53 = sbr.rel (0) target = $region21
    $region20: #{tpu_custom_call.1} parent=1 // pred_region
      _
    $region21: #{tpu_custom_call.1} parent=1 // pred_fallthru
      _
    // Predicated region
    $region22: #{tpu_custom_call.1} parent=1 // pred_check
      _
    $region23: #{tpu_custom_call.1} parent=1 // pred_check_branch
      %55 = sbr.rel (0) target = $region25
    $region24: #{tpu_custom_call.1} parent=1 // pred_region
      %s57 = ssub.s32 1600, 1600
      %58 = vsyncadd [#allocation9], %s57
      %s59 = sshll.u32 [#allocation8], 4
      %s60 = int_to_ptr.vmem [resolvable:$true] %s59
      %65 = dma.hbm_to_vmem [thread:$0]  %s5, 1600, %s60, [#allocation9], 64, 64, 4
    $region25: #{tpu_custom_call.1} parent=1 // pred_fallthru
      _
    // Predicated region
    $region26: #{tpu_custom_call.1} parent=1 // pred_check
      _
    $region27: #{tpu_custom_call.1} parent=1 // pred_check_branch
      %67 = sbr.rel (0) target = $region29
    $region28: #{tpu_custom_call.1} parent=1 // pred_region
      _
    $region29: #{tpu_custom_call.1} parent=1 // pred_fallthru
      _
    // Predicated region
    $region30: #{tpu_custom_call.1} parent=1 // pred_check
      _
    $region31: #{tpu_custom_call.1} parent=1 // pred_check_branch
      %69 = sbr.rel (0) target = $region33
    $region32: #{tpu_custom_call.1} parent=1 // pred_region
      %70 = dma.done [#allocation3], 128
    $region33: #{tpu_custom_call.1} parent=1 // pred_fallthru
      _
    // Predicated region
    $region34: #{tpu_custom_call.1} parent=1 // pred_check
      _
    $region35: #{tpu_custom_call.1} parent=1 // pred_check_branch
      %72 = sbr.rel (0) target = $region37
    $region36: #{tpu_custom_call.1} parent=1 // pred_region
      %73 = dma.done [#allocation6], 512
    $region37: #{tpu_custom_call.1} parent=1 // pred_fallthru
      _
    // Predicated region
    $region38: #{tpu_custom_call.1} parent=1 // pred_check
      _
    $region39: #{tpu_custom_call.1} parent=1 // pred_check_branch
      %75 = sbr.rel (0) target = $region41
    $region40: #{tpu_custom_call.1} parent=1 // pred_region
      %76 = dma.done [#allocation6], 3200
    $region41: #{tpu_custom_call.1} parent=1 // pred_fallthru
      _
    // Predicated region
    $region42: #{tpu_custom_call.1} parent=1 // pred_check
      _
    $region43: #{tpu_custom_call.1} parent=1 // pred_check_branch
      %78 = sbr.rel (0) target = $region45
    $region44: #{tpu_custom_call.1} parent=1 // pred_region
      %79 = dma.done [#allocation9], 1600
    $region45: #{tpu_custom_call.1} parent=1 // pred_fallthru
      _
    %v82 = vld [vmem:[#allocation2] sm:$0xff]
    %v83 = vpack.c.bf16 %v82, %v82
    %v84 = vld [vmem:[#allocation5] sm:$0xff]
    %v85 = vld [vmem:[#allocation5 + $0x8] sm:$0xff]
    %v86 = vld [vmem:[#allocation5 + $0x10] sm:$0xff]
    %v87 = vld [vmem:[#allocation5 + $0x18] sm:$0xff]
    %v92 = vunpack.c.l.b16 %v84
    %v93 = vunpack.c.h.b16 %v84
    %v94 = vunpack.c.l.b16 %v85
    %v95 = vunpack.c.h.b16 %v85
    %v96 = vunpack.c.l.b16 %v86
    %v97 = vunpack.c.h.b16 %v86
    %v98 = vunpack.c.l.b16 %v87
    %v99 = vunpack.c.h.b16 %v87
    %v100 = vpack.c.b16 %v94, %v92
    %v101 = vpack.c.b16 %v95, %v93
    %v102 = vpack.c.b16 %v98, %v96
    %v103 = vpack.c.b16 %v99, %v97
    %vm108 = vcmask 261120
    %v110 = vsel %vm108, %v83, 0
    %112 = vmatprep.subr.bf16.mxu0 %v101
    %113 = vmatpush1.bf16.msra.mxu0 %v100
    %114 = vmatprep.subr.bf16.mxu0 %v103
    %115 = vmatpush1.bf16.msra.mxu0 %v102
    %116 = vmatprep.subr.bf16.mxu0 0
    %117 = vmatpush1.bf16.msra.mxu0 0
    %118 = vmatprep.subr.bf16.mxu0 0
    %119 = vmatpush1.bf16.msra.mxu0 0
    %120 = vmatprep.subr.bf16.mxu0 0
    %121 = vmatpush1.bf16.msra.mxu0 0
    %122 = vmatprep.subr.bf16.mxu0 0
    %123 = vmatpush1.bf16.msra.mxu0 0
    %124 = vmatprep.subr.bf16.mxu0 0
    %125 = vmatpush1.bf16.msra.mxu0 0
    %126 = vmatprep.subr.bf16.mxu0 0
    %127 = vmatpush1.bf16.msra.mxu0 0
    %128 = vmatprep.subr.bf16.mxu0 0
    %129 = vmatpush1.bf16.msra.mxu0 0
    %130 = vmatprep.subr.bf16.mxu0 0
    %131 = vmatpush1.bf16.msra.mxu0 0
    %132 = vmatprep.subr.bf16.mxu0 0
    %133 = vmatpush1.bf16.msra.mxu0 0
    %134 = vmatprep.subr.bf16.mxu0 0
    %135 = vmatpush1.bf16.msra.mxu0 0
    %136 = vmatprep.subr.bf16.mxu0 0
    %137 = vmatpush1.bf16.msra.mxu0 0
    %138 = vmatprep.subr.bf16.mxu0 0
    %139 = vmatpush1.bf16.msra.mxu0 0
    %140 = vmatprep.subr.bf16.mxu0 0
    %141 = vmatpush1.bf16.msra.mxu0 0
    %142 = vmatprep.subr.bf16.mxu0 0
    %143 = vmatpush1.bf16.msra.mxu0 0
    %144 = vmatprep.mubr.bf16.mxu0 0
    %145 = vmatmul.mubr.bf16.gmra.mrb[0].mxu0 %v110
    %v146 = vpop.f32.mrb[0].mxu0
    %v147 = vadd.f32 0.0, %v146
    %v148 = vpop.f32.mrb[0].mxu0
    %v149 = vadd.f32 0.0, %v148
    %v150 = vpop.f32.mrb[0].mxu0
    %v151 = vpop.f32.mrb[0].mxu0
    %152 = vdwg.mxu0
    %v153 = vpack.c.bf16 %v147, %v147
    %v154 = vpack.c.bf16 %v149, %v149
    %v155 = vld [vmem:[%s2] sm:$0x3]
    %v158 = vunpack.c.l.s4 1966171168
    %v159 = vunpack.c.0.s8 %v158
    %v160 = vlaneseq
    %v161 = vshrl.u32 %v160, 7
    %v162 = vsub.s32 %v159, %v161
    %v163 = vrot.slane %v155, %v162
    %v164 = vcombine.high %v163, %v163
    %v166 = vunpack.c.l.s4 1966171168
    %v167 = vunpack.c.0.s8 %v166
    %v168 = vlaneseq
    %v169 = vshrl.u32 %v168, 7
    %v170 = vsub.s32 %v167, %v169
    %v171 = vrot.slane %v163, %v170
    %v173 = vunpack.c.l.s4 1966171168
    %v174 = vunpack.c.0.s8 %v173
    %v175 = vlaneseq
    %v176 = vshrl.u32 %v175, 7
    %v177 = vsub.s32 %v174, %v176
    %v178 = vrot.slane %v164, %v177
    %v180 = vpack.i.b16 %v171, %v171
    %v182 = vlaneseq
    %v183 = vshrl.u32 %v182, 7
    %v184 = vsub.s32 0, %v183
    %v185 = vrot.slane %v180, %v184
    %v187 = vpack.i.b16 %v178, %v178
    %v189 = vlaneseq
    %v190 = vshrl.u32 %v189, 7
    %v191 = vsub.s32 0, %v190
    %v192 = vrot.slane %v187, %v191
    %v193 = vadd.bf16 %v153, %v185
    %v194 = vadd.bf16 %v154, %v192
    %v195 = vtanh.bf16.pop %v193
    %v196 = vtanh.bf16.pop %v194
    %v197 = vld [vmem:[#allocation7] sm:$0xff]
    %v198 = vld [vmem:[#allocation7 + $0x8] sm:$0xff]
    %v199 = vld [vmem:[#allocation7 + $0x10] sm:$0xff]
    %v200 = vld [vmem:[#allocation7 + $0x18] sm:$0xff]
    %v201 = vld [vmem:[#allocation7 + $0x20] sm:$0xff]
    %v202 = vld [vmem:[#allocation7 + $0x28] sm:$0xff]
    %v203 = vld [vmem:[#allocation7 + $0x30] sm:$0xff]
    %v204 = vld [vmem:[#allocation7 + $0x38] sm:$0xff]
    %v205 = vld [vmem:[#allocation7 + $0x40] sm:$0xff]
    %v206 = vld [vmem:[#allocation7 + $0x48] sm:$0xff]
    %v207 = vld [vmem:[#allocation7 + $0x50] sm:$0xff]
    %v208 = vld [vmem:[#allocation7 + $0x58] sm:$0xff]
    %v209 = vld [vmem:[#allocation7 + $0x60] sm:$0xff]
    %v210 = vld [vmem:[#allocation7 + $0x68] sm:$0xff]
    %v211 = vld [vmem:[#allocation7 + $0x70] sm:$0xff]
    %v212 = vld [vmem:[#allocation7 + $0x78] sm:$0xff]
    %v213 = vld [vmem:[#allocation7 + $0x80] sm:$0xff]
    %v214 = vld [vmem:[#allocation7 + $0x88] sm:$0xff]
    %v215 = vld [vmem:[#allocation7 + $0x90] sm:$0xff]
    %v216 = vld [vmem:[#allocation7 + $0x98] sm:$0xff]
    %v217 = vld [vmem:[#allocation7 + $0xa0] sm:$0xff]
    %v218 = vld [vmem:[#allocation7 + $0xa8] sm:$0xff]
    %v219 = vld [vmem:[#allocation7 + $0xb0] sm:$0xff]
    %v220 = vld [vmem:[#allocation7 + $0xb8] sm:$0xff]
    %v221 = vld [vmem:[#allocation7 + $0xc0] sm:$0xff]
    %v247 = vunpack.c.l.b16 %v197
    %v248 = vunpack.c.h.b16 %v197
    %v249 = vunpack.c.l.b16 %v198
    %v250 = vunpack.c.h.b16 %v198
    %v251 = vunpack.c.l.b16 %v199
    %v252 = vunpack.c.h.b16 %v199
    %v253 = vunpack.c.l.b16 %v200
    %v254 = vunpack.c.h.b16 %v200
    %v255 = vunpack.c.l.b16 %v201
    %v256 = vunpack.c.h.b16 %v201
    %v257 = vunpack.c.l.b16 %v202
    %v258 = vunpack.c.h.b16 %v202
    %v259 = vunpack.c.l.b16 %v203
    %v260 = vunpack.c.h.b16 %v203
    %v261 = vunpack.c.l.b16 %v204
    %v262 = vunpack.c.h.b16 %v204
    %v263 = vunpack.c.l.b16 %v205
    %v264 = vunpack.c.h.b16 %v205
    %v265 = vunpack.c.l.b16 %v206
    %v266 = vunpack.c.h.b16 %v206
    %v267 = vunpack.c.l.b16 %v207
    %v268 = vunpack.c.h.b16 %v207
    %v269 = vunpack.c.l.b16 %v208
    %v270 = vunpack.c.h.b16 %v208
    %v271 = vunpack.c.l.b16 %v209
    %v272 = vunpack.c.h.b16 %v209
    %v273 = vunpack.c.l.b16 %v210
    %v274 = vunpack.c.h.b16 %v210
    %v275 = vunpack.c.l.b16 %v211
    %v276 = vunpack.c.h.b16 %v211
    %v277 = vunpack.c.l.b16 %v212
    %v278 = vunpack.c.h.b16 %v212
    %v279 = vunpack.c.l.b16 %v213
    %v280 = vunpack.c.h.b16 %v213
    %v281 = vunpack.c.l.b16 %v214
    %v282 = vunpack.c.h.b16 %v214
    %v283 = vunpack.c.l.b16 %v215
    %v284 = vunpack.c.h.b16 %v215
    %v285 = vunpack.c.l.b16 %v216
    %v286 = vunpack.c.h.b16 %v216
    %v287 = vunpack.c.l.b16 %v217
    %v288 = vunpack.c.h.b16 %v217
    %v289 = vunpack.c.l.b16 %v218
    %v290 = vunpack.c.h.b16 %v218
    %v291 = vunpack.c.l.b16 %v219
    %v292 = vunpack.c.h.b16 %v219
    %v293 = vunpack.c.l.b16 %v220
    %v294 = vunpack.c.h.b16 %v220
    %v295 = vunpack.c.l.b16 %v221
    %v296 = vunpack.c.h.b16 %v221
    %v297 = vpack.c.b16 %v249, %v247
    %v298 = vpack.c.b16 %v250, %v248
    %v299 = vpack.c.b16 %v253, %v251
    %v300 = vpack.c.b16 %v254, %v252
    %v301 = vpack.c.b16 %v257, %v255
    %v302 = vpack.c.b16 %v258, %v256
    %v303 = vpack.c.b16 %v261, %v259
    %v304 = vpack.c.b16 %v262, %v260
    %v305 = vpack.c.b16 %v265, %v263
    %v306 = vpack.c.b16 %v266, %v264
    %v307 = vpack.c.b16 %v269, %v267
    %v308 = vpack.c.b16 %v270, %v268
    %v309 = vpack.c.b16 %v273, %v271
    %v310 = vpack.c.b16 %v274, %v272
    %v311 = vpack.c.b16 %v277, %v275
    %v312 = vpack.c.b16 %v278, %v276
    %v313 = vpack.c.b16 %v281, %v279
    %v314 = vpack.c.b16 %v282, %v280
    %v315 = vpack.c.b16 %v285, %v283
    %v316 = vpack.c.b16 %v286, %v284
    %v317 = vpack.c.b16 %v289, %v287
    %v318 = vpack.c.b16 %v290, %v288
    %v319 = vpack.c.b16 %v293, %v291
    %v320 = vpack.c.b16 %v294, %v292
    %v321 = vpack.c.b16 %v295, %v295
    %v322 = vpack.c.b16 %v296, %v296
    %vm347 = vcmask 588800
    %v349 = vsel %vm347, %v196, 0
    %vm351 = vcmask 1043456
    %v353 = vsel %vm351, %v321, 0
    %v356 = vsel %vm351, %v322, 0
    %358 = vmatprep.subr.bf16.mxu0 %v298
    %359 = vmatpush1.bf16.msra.mxu0 %v297
    %360 = vmatprep.subr.bf16.mxu0 %v300
    %361 = vmatpush1.bf16.msra.mxu0 %v299
    %362 = vmatprep.subr.bf16.mxu0 %v302
    %363 = vmatpush1.bf16.msra.mxu0 %v301
    %364 = vmatprep.subr.bf16.mxu0 %v304
    %365 = vmatpush1.bf16.msra.mxu0 %v303
    %366 = vmatprep.subr.bf16.mxu0 %v306
    %367 = vmatpush1.bf16.msra.mxu0 %v305
    %368 = vmatprep.subr.bf16.mxu0 %v308
    %369 = vmatpush1.bf16.msra.mxu0 %v307
    %370 = vmatprep.subr.bf16.mxu0 %v310
    %371 = vmatpush1.bf16.msra.mxu0 %v309
    %372 = vmatprep.subr.bf16.mxu0 %v312
    %373 = vmatpush1.bf16.msra.mxu0 %v311
    %374 = vmatprep.subr.bf16.mxu0 %v314
    %375 = vmatpush1.bf16.msra.mxu0 %v313
    %376 = vmatprep.subr.bf16.mxu0 %v316
    %377 = vmatpush1.bf16.msra.mxu0 %v315
    %378 = vmatprep.subr.bf16.mxu0 %v318
    %379 = vmatpush1.bf16.msra.mxu0 %v317
    %380 = vmatprep.subr.bf16.mxu0 %v320
    %381 = vmatpush1.bf16.msra.mxu0 %v319
    %382 = vmatprep.subr.bf16.mxu0 %v356
    %383 = vmatpush1.bf16.msra.mxu0 %v353
    %384 = vmatprep.subr.bf16.mxu0 0
    %385 = vmatpush1.bf16.msra.mxu0 0
    %386 = vmatprep.subr.bf16.mxu0 0
    %387 = vmatpush1.bf16.msra.mxu0 0
    %388 = vmatprep.subr.bf16.mxu0 0
    %389 = vmatpush1.bf16.msra.mxu0 0
    %390 = vmatprep.mubr.bf16.mxu0 %v349
    %391 = vmatmul.mubr.bf16.gmra.mrb[0].mxu0 %v195
    %v392 = vpop.f32.mrb[0].mxu0
    %v393 = vadd.f32 0.0, %v392
    %v394 = vpop.f32.mrb[0].mxu0
    %v395 = vadd.f32 0.0, %v394
    %v396 = vpop.f32.mrb[0].mxu0
    %v397 = vpop.f32.mrb[0].mxu0
    %398 = vdwg.mxu0
    %v399 = vpack.c.bf16 %v393, %v393
    %v400 = vpack.c.bf16 %v395, %v395
    %v401 = vld [vmem:[%s4] sm:$0x3]
    %v404 = vunpack.c.l.s4 1966171168
    %v405 = vunpack.c.0.s8 %v404
    %v406 = vlaneseq
    %v407 = vshrl.u32 %v406, 7
    %v408 = vsub.s32 %v405, %v407
    %v409 = vrot.slane %v401, %v408
    %v410 = vcombine.high %v409, %v409
    %v412 = vunpack.c.l.s4 1966171168
    %v413 = vunpack.c.0.s8 %v412
    %v414 = vlaneseq
    %v415 = vshrl.u32 %v414, 7
    %v416 = vsub.s32 %v413, %v415
    %v417 = vrot.slane %v409, %v416
    %v419 = vunpack.c.l.s4 1966171168
    %v420 = vunpack.c.0.s8 %v419
    %v421 = vlaneseq
    %v422 = vshrl.u32 %v421, 7
    %v423 = vsub.s32 %v420, %v422
    %v424 = vrot.slane %v410, %v423
    %v426 = vpack.i.b16 %v417, %v417
    %v428 = vlaneseq
    %v429 = vshrl.u32 %v428, 7
    %v430 = vsub.s32 0, %v429
    %v431 = vrot.slane %v426, %v430
    %v433 = vpack.i.b16 %v424, %v424
    %v435 = vlaneseq
    %v436 = vshrl.u32 %v435, 7
    %v437 = vsub.s32 0, %v436
    %v438 = vrot.slane %v433, %v437
    %v439 = vadd.bf16 %v399, %v431
    %v440 = vadd.bf16 %v400, %v438
    %v441 = vtanh.bf16.pop %v439
    %v442 = vtanh.bf16.pop %v440
    %v443 = vld [vmem:[#allocation8] sm:$0xf]
    %v444 = vld [vmem:[#allocation8 + $0x4] sm:$0xf]
    %v445 = vld [vmem:[#allocation8 + $0x8] sm:$0xf]
    %v446 = vld [vmem:[#allocation8 + $0xc] sm:$0xf]
    %v447 = vld [vmem:[#allocation8 + $0x10] sm:$0xf]
    %v448 = vld [vmem:[#allocation8 + $0x14] sm:$0xf]
    %v449 = vld [vmem:[#allocation8 + $0x18] sm:$0xf]
    %v450 = vld [vmem:[#allocation8 + $0x1c] sm:$0xf]
    %v451 = vld [vmem:[#allocation8 + $0x20] sm:$0xf]
    %v452 = vld [vmem:[#allocation8 + $0x24] sm:$0xf]
    %v453 = vld [vmem:[#allocation8 + $0x28] sm:$0xf]
    %v454 = vld [vmem:[#allocation8 + $0x2c] sm:$0xf]
    %v455 = vld [vmem:[#allocation8 + $0x30] sm:$0xf]
    %v456 = vld [vmem:[#allocation8 + $0x34] sm:$0xf]
    %v457 = vld [vmem:[#allocation8 + $0x38] sm:$0xf]
    %v458 = vld [vmem:[#allocation8 + $0x3c] sm:$0xf]
    %v459 = vld [vmem:[#allocation8 + $0x40] sm:$0xf]
    %v460 = vld [vmem:[#allocation8 + $0x44] sm:$0xf]
    %v461 = vld [vmem:[#allocation8 + $0x48] sm:$0xf]
    %v462 = vld [vmem:[#allocation8 + $0x4c] sm:$0xf]
    %v463 = vld [vmem:[#allocation8 + $0x50] sm:$0xf]
    %v464 = vld [vmem:[#allocation8 + $0x54] sm:$0xf]
    %v465 = vld [vmem:[#allocation8 + $0x58] sm:$0xf]
    %v466 = vld [vmem:[#allocation8 + $0x5c] sm:$0xf]
    %v467 = vld [vmem:[#allocation8 + $0x60] sm:$0xf]
    %v493 = vunpack.c.l.b16 %v443
    %v494 = vunpack.c.l.b16 %v444
    %v495 = vunpack.c.l.b16 %v445
    %v496 = vunpack.c.l.b16 %v446
    %v497 = vunpack.c.l.b16 %v447
    %v498 = vunpack.c.l.b16 %v448
    %v499 = vunpack.c.l.b16 %v449
    %v500 = vunpack.c.l.b16 %v450
    %v501 = vunpack.c.l.b16 %v451
    %v502 = vunpack.c.l.b16 %v452
    %v503 = vunpack.c.l.b16 %v453
    %v504 = vunpack.c.l.b16 %v454
    %v505 = vunpack.c.l.b16 %v455
    %v506 = vunpack.c.l.b16 %v456
    %v507 = vunpack.c.l.b16 %v457
    %v508 = vunpack.c.l.b16 %v458
    %v509 = vunpack.c.l.b16 %v459
    %v510 = vunpack.c.l.b16 %v460
    %v511 = vunpack.c.l.b16 %v461
    %v512 = vunpack.c.l.b16 %v462
    %v513 = vunpack.c.l.b16 %v463
    %v514 = vunpack.c.l.b16 %v464
    %v515 = vunpack.c.l.b16 %v465
    %v516 = vunpack.c.l.b16 %v466
    %v517 = vunpack.c.l.b16 %v467
    %v518 = vpack.c.b16 %v494, %v493
    %v519 = vpack.c.b16 %v496, %v495
    %v520 = vpack.c.b16 %v498, %v497
    %v521 = vpack.c.b16 %v500, %v499
    %v522 = vpack.c.b16 %v502, %v501
    %v523 = vpack.c.b16 %v504, %v503
    %v524 = vpack.c.b16 %v506, %v505
    %v525 = vpack.c.b16 %v508, %v507
    %v526 = vpack.c.b16 %v510, %v509
    %v527 = vpack.c.b16 %v512, %v511
    %v528 = vpack.c.b16 %v514, %v513
    %v529 = vpack.c.b16 %v516, %v515
    %v530 = vpack.c.b16 %v517, %v517
    %v544 = vsel %vm347, %v442, 0
    %v547 = vsel %vm351, %v530, 0
    %549 = vmatprep.subr.bf16.mxu0 0
    %550 = vmatpush1.bf16.msra.mxu0 %v518
    %551 = vmatprep.subr.bf16.mxu0 0
    %552 = vmatpush1.bf16.msra.mxu0 %v519
    %553 = vmatprep.subr.bf16.mxu0 0
    %554 = vmatpush1.bf16.msra.mxu0 %v520
    %555 = vmatprep.subr.bf16.mxu0 0
    %556 = vmatpush1.bf16.msra.mxu0 %v521
    %557 = vmatprep.subr.bf16.mxu0 0
    %558 = vmatpush1.bf16.msra.mxu0 %v522
    %559 = vmatprep.subr.bf16.mxu0 0
    %560 = vmatpush1.bf16.msra.mxu0 %v523
    %561 = vmatprep.subr.bf16.mxu0 0
    %562 = vmatpush1.bf16.msra.mxu0 %v524
    %563 = vmatprep.subr.bf16.mxu0 0
    %564 = vmatpush1.bf16.msra.mxu0 %v525
    %565 = vmatprep.subr.bf16.mxu0 0
    %566 = vmatpush1.bf16.msra.mxu0 %v526
    %567 = vmatprep.subr.bf16.mxu0 0
    %568 = vmatpush1.bf16.msra.mxu0 %v527
    %569 = vmatprep.subr.bf16.mxu0 0
    %570 = vmatpush1.bf16.msra.mxu0 %v528
    %571 = vmatprep.subr.bf16.mxu0 0
    %572 = vmatpush1.bf16.msra.mxu0 %v529
    %573 = vmatprep.subr.bf16.mxu0 0
    %574 = vmatpush1.bf16.msra.mxu0 %v547
    %575 = vmatprep.subr.bf16.mxu0 0
    %576 = vmatpush1.bf16.msra.mxu0 0
    %577 = vmatprep.subr.bf16.mxu0 0
    %578 = vmatpush1.bf16.msra.mxu0 0
    %579 = vmatprep.subr.bf16.mxu0 0
    %580 = vmatpush1.bf16.msra.mxu0 0
    %581 = vmatprep.mubr.bf16.mxu0 %v544
    %582 = vmatmul.mubr.bf16.gmra.mrb[0].mxu0 %v441
    %v583 = vpop.f32.mrb[0].mxu0
    %v584 = vadd.f32 0.0, %v583
    %v585 = vpop.f32.mrb[0].mxu0
    %v586 = vpop.f32.mrb[0].mxu0
    %v587 = vpop.f32.mrb[0].mxu0
    %588 = vdwg.mxu0
    %v589 = vpack.c.bf16 %v584, %v584
    %v590 = vld [vmem:[%s6] sm:$0x1]
    %v592 = vpack.i.b16 %v590, %v590
    %v594 = vlaneseq
    %v595 = vshrl.u32 %v594, 7
    %v596 = vsub.s32 0, %v595
    %v597 = vrot.slane %v592, %v596
    %v598 = vadd.bf16 %v589, %v597
    %v599 = vxor.u32 %v598, 2147516416
    %v601 = vmul.bf16 %v599, 1069105081
    %v602 = vpow.bf16.pop %v601
    %v603 = vadd.bf16 %v602, 1065369472
    %v604 = vrcp.bf16.pop %v603
    %v605 = vmul.bf16 1065369472, %v604
    %606 = vst [vmem:[#allocation10] sm:$0xf] %v605
    // Predicated region
    $region46: #{tpu_custom_call.1} parent=1 // pred_check
      _
    $region47: #{tpu_custom_call.1} parent=1 // pred_check_branch
      %608 = sbr.rel (0) target = $region49
    $region48: #{tpu_custom_call.1} parent=1 // pred_region
      %s610 = ssub.s32 64, 64
      %611 = vsyncadd [#allocation4], %s610
      %s613 = sshll.u32 [#allocation10], 4
      %s614 = int_to_ptr.vmem [resolvable:$true] %s613
      %616 = dma.vmem_to_hbm [thread:$0]  %s614, 64, %s7, [#allocation4]
    $region49: #{tpu_custom_call.1} parent=1 // pred_fallthru
      _
    // Predicated region
    $region50: #{tpu_custom_call.1} parent=1 // pred_check
      _
    $region51: #{tpu_custom_call.1} parent=1 // pred_check_branch
      %618 = sbr.rel (0) target = $region53
    $region52: #{tpu_custom_call.1} parent=1 // pred_region
      %619 = dma.done [#allocation4], 64
    $region53: #{tpu_custom_call.1} parent=1 // pred_fallthru
      _
    %620 = vsyncpa [#allocation3], 1
    %621 = vsyncpa [#allocation6], 1
    %622 = vsyncpa [#allocation9], 1
    %623 = vsyncpa [#allocation4], 1

</llo_original>
